<compile_context>
chip_gen: v7x
topology: tpu7x:2x2x1
jax: 0.10.0
libtpu: 0.0.40
codegen_flags: <defaults>
</compile_context>

<pallas_src>
import jax
import jax.numpy as jnp
from jax.experimental import pallas as pl
from jax.experimental.pallas import tpu as pltpu

_LANE = 128
_SUBLANE = 8


def _output_layer_kernel(x_ref, w_ref, b_ref, o_ref):
    # x_ref: (TN, C, H*W)  -> global 8x8 average pool over the last (lane) axis
    # w_ref: (C, NC_pad)   zero-padded transposed nn.Linear weight (VMEM-resident)
    # b_ref: (1, NC_pad)   zero-padded bias (VMEM-resident)
    # o_ref: (TN, NC_pad)  lane-dense output tile
    x = x_ref[...].astype(jnp.float32)               # f32 accumulation (bf16-safe)
    pooled = jnp.mean(x, axis=-1)                    # (TN, C) == avg_pool2d(x, 8) + view
    logits = jnp.dot(pooled, w_ref[...].astype(jnp.float32),
                     preferred_element_type=jnp.float32)
    o_ref[...] = (logits + b_ref[...].astype(jnp.float32)).astype(o_ref.dtype)


def _choose_batch_tile(n, c, hw, itemsize):
    """Largest batch tile whose double-buffered input stays well under the scoped
    VMEM limit on every TPU generation (budget ~8 MiB per input buffer)."""
    per_row = c * hw * itemsize
    budget = 8 * 1024 * 1024
    tn = max(_SUBLANE, (budget // max(per_row, 1)) // _SUBLANE * _SUBLANE)
    tn = min(tn, 1024)
    if n <= tn:
        return n                                     # single full-extent block
    return tn


def output_layer_forward(x_nchw, weight, bias):
    """x_nchw: (N, C, 8, 8) float32/bfloat16
       weight: (num_classes, C)   (PyTorch nn.Linear layout)
       bias:   (num_classes,)
       returns (N, num_classes)"""
    N, C, H, W = x_nchw.shape
    assert H == 8 and W == 8, "avg_pool2d(x, 8) + view(-1, filters) implies 8x8 spatial"
    HW = H * W
    num_classes = weight.shape[0]
    nc_pad = pl.cdiv(num_classes, _LANE) * _LANE

    x_flat = x_nchw.reshape(N, C, HW)                # contiguous reshape, no extra HBM pass
    # TODO(synk): if the upstream producer can emit channels-last (N, H*W, C),
    # consume that layout directly (reduce over axis=-2) for lane-dense input
    # vregs; adding a standalone transpose here would cost an extra HBM pass.

    w_pad = jnp.pad(weight.T.astype(jnp.float32), ((0, 0), (0, nc_pad - num_classes)))
    b_pad = jnp.pad(bias.astype(jnp.float32), (0, nc_pad - num_classes)).reshape(1, nc_pad)

    itemsize = jnp.dtype(x_nchw.dtype).itemsize
    tn = _choose_batch_tile(N, C, HW, itemsize)
    grid = (pl.cdiv(N, tn),)

    tile_in_bytes = tn * C * HW * itemsize
    w_bytes = C * nc_pad * 4
    out_tile_bytes = tn * nc_pad * itemsize
    vmem_limit = int(min(48 * 1024 * 1024,                       # safe on v7x (64 MiB phys)
                         max(16 * 1024 * 1024,
                             2 * tile_in_bytes + 2 * w_bytes + 2 * out_tile_bytes
                             + (2 << 20))))

    cost = pl.CostEstimate(
        flops=int(N * C * HW + 2 * N * C * nc_pad),
        transcendentals=0,
        bytes_accessed=int(N * C * HW * itemsize + w_bytes + nc_pad * 4
                           + N * nc_pad * itemsize),
    )

    out_pad = pl.pallas_call(
        _output_layer_kernel,
        out_shape=jax.ShapeDtypeStruct((N, nc_pad), x_nchw.dtype),
        grid_spec=pltpu.PrefetchScalarGridSpec(
            num_scalar_prefetch=0,
            grid=grid,
            in_specs=[
                pl.BlockSpec((tn, C, HW), lambda i: (i, 0, 0)),   # batch-tiled, double-buffered
                pl.BlockSpec((C, nc_pad), lambda i: (0, 0)),      # weight: VMEM-resident
                pl.BlockSpec((1, nc_pad), lambda i: (0, 0)),      # bias: VMEM-resident
            ],
            out_specs=pl.BlockSpec((tn, nc_pad), lambda i: (i, 0)),
        ),
        compiler_params=pltpu.CompilerParams(
            dimension_semantics=("parallel",),                    # shards tiles across v7x's 2 TCs
            vmem_limit_bytes=vmem_limit,
        ),
        cost_estimate=cost,
    )(x_flat, w_pad, b_pad)

    return out_pad[:, :num_classes]


if __name__ == "__main__":
    # Small deterministic example: batch=2, filters=32, spatial=8x8, classes=10
    N, filters, num_classes = 2, 32, 10
    key = jax.random.PRNGKey(0)
    kx, kw, kb = jax.random.split(key, 3)

    x = jax.random.normal(kx, (N, filters, 8, 8), dtype=jnp.float32)
    bound = 1.0 / (filters ** 0.5)
    weight = jax.random.uniform(kw, (num_classes, filters), jnp.float32, -bound, bound)
    bias = jax.random.uniform(kb, (num_classes,), jnp.float32, -bound, bound)

    out = output_layer_forward(x, weight, bias)
    out = jax.block_until_ready(out)

    # Reference check in plain JAX (same math as the PyTorch forward)
    ref = jnp.mean(x.reshape(N, filters, 64), axis=-1) @ weight.T + bias
    assert out.shape == (N, num_classes)
    assert jnp.allclose(out, ref, atol=1e-5, rtol=1e-5)

    print("KERNEL_OK")
</pallas_src>

<mosaic_0001>
module attributes {stable_mosaic.version = 11 : i64} {
  func.func @_output_layer_kernel(%arg0: i32, %arg1: memref<2x32x64xf32, #tpu.memory_space<vmem>>, %arg2: memref<32x128xf32, #tpu.memory_space<vmem>>, %arg3: memref<1x128xf32, #tpu.memory_space<vmem>>, %arg4: memref<2x128xf32, #tpu.memory_space<vmem>>) attributes {dimension_semantics = [#tpu.dimension_semantics<parallel>], iteration_bounds = array<i64: 1>, scalar_prefetch = 0 : i64, scratch_operands = 0 : i64, tpu.core_type = #tpu.core_type<tc>, window_params = [{transform_indices = @transform_0, window_bounds = array<i64: 2, 32, 64>}, {pipeline_mode = #tpu.pipeline_mode<synchronous>, transform_indices = @transform_1, window_bounds = array<i64: 32, 128>}, {pipeline_mode = #tpu.pipeline_mode<synchronous>, transform_indices = @transform_2, window_bounds = array<i64: 1, 128>}, {transform_indices = @transform_3, window_bounds = array<i64: 2, 128>}]} {
    %c0 = arith.constant 0 : index
    %c0_0 = arith.constant 0 : index
    %c0_1 = arith.constant 0 : index
    %0 = vector.load %arg1[%c0, %c0_0, %c0_1] : memref<2x32x64xf32, #tpu.memory_space<vmem>>, vector<2x32x64xf32>
    %cst = arith.constant dense<0.000000e+00> : vector<2x32xf32>
    %1 = vector.multi_reduction <add>, %0, %cst [2] : vector<2x32x64xf32> to vector<2x32xf32>
    %cst_2 = arith.constant 6.400000e+01 : f32
    %2 = vector.broadcast %cst_2 : f32 to vector<2x32xf32>
    %3 = arith.divf %1, %2 : vector<2x32xf32>
    %c0_3 = arith.constant 0 : index
    %c0_4 = arith.constant 0 : index
    %4 = vector.load %arg2[%c0_3, %c0_4] : memref<32x128xf32, #tpu.memory_space<vmem>>, vector<32x128xf32>
    %cst_5 = arith.constant dense<0.000000e+00> : vector<2x128xf32>
    %5 = tpu.matmul %3, %4, %cst_5 {dimension_numbers = #tpu.dot_dimension_numbers<[1], [0], [0], [1], [0, 0, 1, 1], [], []>} : vector<2x32xf32>, vector<32x128xf32>, vector<2x128xf32> -> vector<2x128xf32>
    %c0_6 = arith.constant 0 : index
    %c0_7 = arith.constant 0 : index
    %6 = vector.load %arg3[%c0_6, %c0_7] : memref<1x128xf32, #tpu.memory_space<vmem>>, vector<1x128xf32>
    %7 = vector.broadcast %6 : vector<1x128xf32> to vector<2x128xf32>
    %8 = arith.addf %5, %7 : vector<2x128xf32>
    %c0_8 = arith.constant 0 : index
    %c0_9 = arith.constant 0 : index
    %9 = vector.load %arg4[%c0_8, %c0_9] : memref<2x128xf32, #tpu.memory_space<vmem>>, vector<2x128xf32>
    tpu.vector_store %arg4[%c0_8, %c0_9], %8 {strides = array<i32>} : memref<2x128xf32, #tpu.memory_space<vmem>>, vector<2x128xf32>,
    return
  }
  func.func @transform_0(%arg0: i32) -> (i32, i32, i32) {
    %c0_i32 = arith.constant 0 : i32
    %c0_i32_0 = arith.constant 0 : i32
    %c0_i32_1 = arith.constant 0 : i32
    return %arg0, %c0_i32, %c0_i32_0 : i32, i32, i32
  }
  func.func @transform_1(%arg0: i32) -> (i32, i32) {
    %c0_i32 = arith.constant 0 : i32
    %c0_i32_0 = arith.constant 0 : i32
    %c0_i32_1 = arith.constant 0 : i32
    return %c0_i32, %c0_i32_0 : i32, i32
  }
  func.func @transform_2(%arg0: i32) -> (i32, i32) {
    %c0_i32 = arith.constant 0 : i32
    %c0_i32_0 = arith.constant 0 : i32
    %c0_i32_1 = arith.constant 0 : i32
    return %c0_i32, %c0_i32_0 : i32, i32
  }
  func.func @transform_3(%arg0: i32) -> (i32, i32) {
    %c0_i32 = arith.constant 0 : i32
    %c0_i32_0 = arith.constant 0 : i32
    return %arg0, %c0_i32 : i32, i32
  }
}

</mosaic_0001>

<llo_original>
// kernel: tpu_custom_call.1
$region0: #{tpu_custom_call.1}
  #allocation0 [shape = 'u32[]', space=smem, size = 0x4, offset = 0x4, fixed_abs, tag = 'smem constant byte address 0x4 - core index']
  #allocation1 [shape = 'u32[144,128]{1,0:T(1,128)}', space=vmem, size = 0x12000, scoped, tag = 'internal scratch']
  %s0 = inlined_call_operand.hbm [shape: f32[2,32,64], index: 0, kind: input, shape index: {}]
  %s1 = inlined_call_operand.hbm [shape: f32[32,128], index: 1, kind: input, shape index: {}]
  %s2 = inlined_call_operand.vmem [shape: f32[1,128], index: 2, kind: input, shape index: {}]
  %s3 = inlined_call_operand.hbm [shape: f32[2,128], index: 3, kind: output, shape index: {}]
  %s4 = sld [smem:[#allocation0]]
  $region30: #{tpu_custom_call.1} parent=0
    _
  %s6 = ssub.s32 1, %s4
  %s7 = scalar_select 0, %s6, %s4
  $region1: #{tpu_custom_call.1} parent=0
    #allocation2 [shape = 'u8[32768]{0}', space=vmem, size = 0x8000, scoped, tag = 'input window, operand 0, single buffered']
    #allocation3 [shape = 's32[1]{0}', space=sflag, size = 0x4, scoped, tag = 'scoped memory for tpu_custom_call.1']
    #allocation4 [shape = 's32[1]{0}', space=sflag, size = 0x4, scoped, tag = 'scoped memory for tpu_custom_call.1']
    #allocation5 [shape = 'u8[16384]{0}', space=vmem, size = 0x4000, scoped, tag = 'input window, operand 1, single buffered']
    #allocation6 [shape = 's32[1]{0}', space=sflag, size = 0x4, scoped, tag = 'scoped memory for tpu_custom_call.1']
    #allocation7 [shape = 'u8[1024]{0}', space=vmem, size = 0x400, scoped, tag = 'output window, operand 0, single buffered']
    %8 = vsyncpa [#allocation3], 0
    %9 = vsyncpa [#allocation6], 0
    %10 = vsyncpa [#allocation4], 0
    // Predicated region
    $region2: #{tpu_custom_call.1} parent=1 // pred_check
      _
    $region3: #{tpu_custom_call.1} parent=1 // pred_check_branch
      %12 = sbr.rel (0) target = $region5
    $region4: #{tpu_custom_call.1} parent=1 // pred_region
      %s14 = ssub.s32 1024, 1024
      %15 = vsyncadd [#allocation3], %s14
      %s16 = sshll.u32 [#allocation2], 4
      %s17 = int_to_ptr.vmem [resolvable:$true] %s16
      %22 = dma.hbm_to_vmem [thread:$0]  %s0, 1024, %s17, [#allocation3], 128, 128, 8
    $region5: #{tpu_custom_call.1} parent=1 // pred_fallthru
      _
    // Predicated region
    $region6: #{tpu_custom_call.1} parent=1 // pred_check
      _
    $region7: #{tpu_custom_call.1} parent=1 // pred_check_branch
      %24 = sbr.rel (0) target = $region9
    $region8: #{tpu_custom_call.1} parent=1 // pred_region
      %s26 = ssub.s32 512, 512
      %27 = vsyncadd [#allocation6], %s26
      %s28 = sshll.u32 [#allocation5], 4
      %s29 = int_to_ptr.vmem [resolvable:$true] %s28
      %34 = dma.hbm_to_vmem [thread:$0]  %s1, 512, %s29, [#allocation6], 128, 128, 8
    $region9: #{tpu_custom_call.1} parent=1 // pred_fallthru
      _
    // Predicated region
    $region10: #{tpu_custom_call.1} parent=1 // pred_check
      _
    $region11: #{tpu_custom_call.1} parent=1 // pred_check_branch
      %36 = sbr.rel (0) target = $region13
    $region12: #{tpu_custom_call.1} parent=1 // pred_region
      _
    $region13: #{tpu_custom_call.1} parent=1 // pred_fallthru
      _
    // Predicated region
    $region14: #{tpu_custom_call.1} parent=1 // pred_check
      _
    $region15: #{tpu_custom_call.1} parent=1 // pred_check_branch
      %38 = sbr.rel (0) target = $region17
    $region16: #{tpu_custom_call.1} parent=1 // pred_region
      %39 = dma.done [#allocation3], 1024
    $region17: #{tpu_custom_call.1} parent=1 // pred_fallthru
      _
    // Predicated region
    $region18: #{tpu_custom_call.1} parent=1 // pred_check
      _
    $region19: #{tpu_custom_call.1} parent=1 // pred_check_branch
      %41 = sbr.rel (0) target = $region21
    $region20: #{tpu_custom_call.1} parent=1 // pred_region
      %42 = dma.done [#allocation6], 512
    $region21: #{tpu_custom_call.1} parent=1 // pred_fallthru
      _
    %v43 = vld [vmem:[#allocation2] sm:$0xff]
    %v44 = vld [vmem:[#allocation2 + $0x8] sm:$0xff]
    %v45 = vld [vmem:[#allocation2 + $0x10] sm:$0xff]
    %v46 = vld [vmem:[#allocation2 + $0x18] sm:$0xff]
    %v47 = vld [vmem:[#allocation2 + $0x20] sm:$0xff]
    %v48 = vld [vmem:[#allocation2 + $0x28] sm:$0xff]
    %v49 = vld [vmem:[#allocation2 + $0x30] sm:$0xff]
    %v50 = vld [vmem:[#allocation2 + $0x38] sm:$0xff]
    %vm51 = vcmask 523264
    %v52 = vsel %vm51, %v43, 0.0
    %53 = vadd.xlane.f32.xlu0 %v52
    %v54 = vpop.xlane.xlu0 %53
    %v55 = vsel %vm51, %v44, 0.0
    %56 = vadd.xlane.f32.xlu0 %v55
    %v57 = vpop.xlane.xlu0 %56
    %v58 = vsel %vm51, %v45, 0.0
    %59 = vadd.xlane.f32.xlu0 %v58
    %v60 = vpop.xlane.xlu0 %59
    %v61 = vsel %vm51, %v46, 0.0
    %62 = vadd.xlane.f32.xlu0 %v61
    %v63 = vpop.xlane.xlu0 %62
    %v64 = vsel %vm51, %v47, 0.0
    %65 = vadd.xlane.f32.xlu0 %v64
    %v66 = vpop.xlane.xlu0 %65
    %v67 = vsel %vm51, %v48, 0.0
    %68 = vadd.xlane.f32.xlu0 %v67
    %v69 = vpop.xlane.xlu0 %68
    %v70 = vsel %vm51, %v49, 0.0
    %71 = vadd.xlane.f32.xlu0 %v70
    %v72 = vpop.xlane.xlu0 %71
    %v73 = vsel %vm51, %v50, 0.0
    %74 = vadd.xlane.f32.xlu0 %v73
    %v75 = vpop.xlane.xlu0 %74
    %v76 = vrcp.pop 64.0
    %v77 = vmul.f32 %v54, %v76
    %v78 = vmul.f32 %v57, %v76
    %v79 = vmul.f32 %v60, %v76
    %v80 = vmul.f32 %v63, %v76
    %v81 = vmul.f32 %v66, %v76
    %v82 = vmul.f32 %v69, %v76
    %v83 = vmul.f32 %v72, %v76
    %v84 = vmul.f32 %v75, %v76
    %v85 = vld [vmem:[#allocation5] sm:$0xff]
    %v86 = vld [vmem:[#allocation5 + $0x8] sm:$0xff]
    %v87 = vld [vmem:[#allocation5 + $0x10] sm:$0xff]
    %v88 = vld [vmem:[#allocation5 + $0x18] sm:$0xff]
    %v89 = vld [vmem:[%s2] sm:$0x1]
    %v91 = vlaneseq
    %v92 = vshrl.u32 %v91, 7
    %v93 = vsub.s32 0, %v92
    %v94 = vrot.slane %v89, %v93
    %v104 = vlaneseq
    %v105 = vand.u32 %v104, 127
    %v106 = vlaneseq
    %v107 = vshrl.u32 %v106, 7
    %v108 = vsub.s32 %v105, %v107
    %v109 = vrot.slane %v77, %v108
    %v110 = vadd.s32 %v105, 4294967288
    %v111 = vlaneseq
    %v112 = vshrl.u32 %v111, 7
    %v113 = vsub.s32 %v110, %v112
    %v114 = vrot.slane %v78, %v113
    %vm115 = vcmask 130112
    %v116 = vsel %vm115, %v114, %v109
    %v117 = vadd.s32 %v105, 4294967280
    %v118 = vlaneseq
    %v119 = vshrl.u32 %v118, 7
    %v120 = vsub.s32 %v117, %v119
    %v121 = vrot.slane %v79, %v120
    %vm122 = vcmask 195712
    %v123 = vsel %vm122, %v121, %v116
    %v124 = vadd.s32 %v105, 4294967272
    %v125 = vlaneseq
    %v126 = vshrl.u32 %v125, 7
    %v127 = vsub.s32 %v124, %v126
    %v128 = vrot.slane %v80, %v127
    %vm129 = vcmask 261312
    %v130 = vsel %vm129, %v128, %v123
    %v131 = vlaneseq
    %v132 = vshrl.u32 %v131, 7
    %v133 = vsub.s32 %v105, %v132
    %v134 = vrot.slane %v81, %v133
    %v135 = vlaneseq
    %v136 = vshrl.u32 %v135, 7
    %v137 = vsub.s32 %v110, %v136
    %v138 = vrot.slane %v82, %v137
    %v139 = vsel %vm115, %v138, %v134
    %v140 = vlaneseq
    %v141 = vshrl.u32 %v140, 7
    %v142 = vsub.s32 %v117, %v141
    %v143 = vrot.slane %v83, %v142
    %v144 = vsel %vm122, %v143, %v139
    %v145 = vlaneseq
    %v146 = vshrl.u32 %v145, 7
    %v147 = vsub.s32 %v124, %v146
    %v148 = vrot.slane %v84, %v147
    %v149 = vsel %vm129, %v148, %v144
    %vm150 = vcmask 1041409
    %v151 = vsel %vm150, %v149, %v130
    %vm152 = vcmask 261120
    %v153 = vsel %vm152, %v151, 0
    %155 = vmatprep.subr.mxu0 0.0
    %156 = vmatpush1.msra.mxu0 %v85
    %157 = vmatprep.subr.mxu0 0.0
    %158 = vmatpush1.msra.mxu0 %v86
    %159 = vmatprep.subr.mxu0 0.0
    %160 = vmatpush1.msra.mxu0 %v87
    %161 = vmatprep.subr.mxu0 0.0
    %162 = vmatpush1.msra.mxu0 %v88
    %163 = vmatprep.subr.mxu0 0.0
    %164 = vmatpush1.msra.mxu0 0.0
    %165 = vmatprep.subr.mxu0 0.0
    %166 = vmatpush1.msra.mxu0 0.0
    %167 = vmatprep.subr.mxu0 0.0
    %168 = vmatpush1.msra.mxu0 0.0
    %169 = vmatprep.subr.mxu0 0.0
    %170 = vmatpush1.msra.mxu0 0.0
    %171 = vmatprep.subr.mxu0 0.0
    %172 = vmatpush1.msra.mxu0 0.0
    %173 = vmatprep.subr.mxu0 0.0
    %174 = vmatpush1.msra.mxu0 0.0
    %175 = vmatprep.subr.mxu0 0.0
    %176 = vmatpush1.msra.mxu0 0.0
    %177 = vmatprep.subr.mxu0 0.0
    %178 = vmatpush1.msra.mxu0 0.0
    %179 = vmatprep.subr.mxu0 0.0
    %180 = vmatpush1.msra.mxu0 0.0
    %181 = vmatprep.subr.mxu0 0.0
    %182 = vmatpush1.msra.mxu0 0.0
    %183 = vmatprep.subr.mxu0 0.0
    %184 = vmatpush1.msra.mxu0 0.0
    %185 = vmatprep.subr.mxu0 0.0
    %186 = vmatpush1.msra.mxu0 0.0
    %187 = vmatprep.subr.mxu0 0.0
    %188 = vmatpush1.msra.mxu0 0.0
    %189 = vmatprep.subr.mxu0 0.0
    %190 = vmatpush1.msra.mxu0 0.0
    %191 = vmatprep.subr.mxu0 0.0
    %192 = vmatpush1.msra.mxu0 0.0
    %193 = vmatprep.subr.mxu0 0.0
    %194 = vmatpush1.msra.mxu0 0.0
    %195 = vmatprep.subr.mxu0 0.0
    %196 = vmatpush1.msra.mxu0 0.0
    %197 = vmatprep.subr.mxu0 0.0
    %198 = vmatpush1.msra.mxu0 0.0
    %199 = vmatprep.subr.mxu0 0.0
    %200 = vmatpush1.msra.mxu0 0.0
    %201 = vmatprep.subr.mxu0 0.0
    %202 = vmatpush1.msra.mxu0 0.0
    %203 = vmatprep.subr.mxu0 0.0
    %204 = vmatpush1.msra.mxu0 0.0
    %205 = vmatprep.subr.mxu0 0.0
    %206 = vmatpush1.msra.mxu0 0.0
    %207 = vmatprep.subr.mxu0 0.0
    %208 = vmatpush1.msra.mxu0 0.0
    %209 = vmatprep.subr.mxu0 0.0
    %210 = vmatpush1.msra.mxu0 0.0
    %211 = vmatprep.subr.mxu0 0.0
    %212 = vmatpush1.msra.mxu0 0.0
    %213 = vmatprep.subr.mxu0 0.0
    %214 = vmatpush1.msra.mxu0 0.0
    %215 = vmatprep.subr.mxu0 0.0
    %216 = vmatpush1.msra.mxu0 0.0
    %217 = vmatprep.subr.mxu0 0.0
    %218 = vmatpush1.msra.mxu0 0.0
    %219 = vmatprep.mubr.f32.mxu0 0.0
    %220 = vmatmul.mubr.f32.gmra.mrb[0].mxu0 %v153
    %v221 = vpop.f32.mrb[0].mxu0
    %v222 = vadd.f32 %v94, %v221
    %v223 = vpop.f32.mrb[0].mxu0
    %224 = vdwg.mxu0
    %225 = vst [vmem:[#allocation7] sm:$0x3] %v222
    // Predicated region
    $region22: #{tpu_custom_call.1} parent=1 // pred_check
      _
    $region23: #{tpu_custom_call.1} parent=1 // pred_check_branch
      %227 = sbr.rel (0) target = $region25
    $region24: #{tpu_custom_call.1} parent=1 // pred_region
      %s229 = ssub.s32 32, 32
      %230 = vsyncadd [#allocation4], %s229
      %s232 = sshll.u32 [#allocation7], 4
      %s233 = int_to_ptr.vmem [resolvable:$true] %s232
      %235 = dma.vmem_to_hbm [thread:$0]  %s233, 32, %s3, [#allocation4]
    $region25: #{tpu_custom_call.1} parent=1 // pred_fallthru
      _
    // Predicated region
    $region26: #{tpu_custom_call.1} parent=1 // pred_check
      _
    $region27: #{tpu_custom_call.1} parent=1 // pred_check_branch
      %237 = sbr.rel (0) target = $region29
    $region28: #{tpu_custom_call.1} parent=1 // pred_region
      %238 = dma.done [#allocation4], 32
    $region29: #{tpu_custom_call.1} parent=1 // pred_fallthru
      _
    %239 = vsyncpa [#allocation3], 1
    %240 = vsyncpa [#allocation6], 1
    %241 = vsyncpa [#allocation4], 1

</llo_original>
